<compile_context>
chip_gen: v5e
topology: v5e:2x2
jax: 0.10.0
libtpu: 0.0.40
codegen_flags: <defaults>
</compile_context>

<pallas_src>
import functools

import jax
import jax.numpy as jnp
from jax.experimental import pallas as pl
from jax.experimental.pallas import tpu as pltpu


def _round_up(x, m):
    return ((x + m - 1) // m) * m


def ego_attention_kernel(x_ref, ego_ref, madd_ref, wq_ref, wk_ref, wv_ref,
                         wc_ref, hsum_ref, selh_ref, out_ref, *,
                         return_attention):
    """One batch tile (TB rows) per grid step.

    x_ref    : (TB, Ep, F)   fused entities, entity 0 = ego (Ep = E padded to 8k)
    ego_ref  : (TB, F)       ego feature row (for Q projection and residual)
    madd_ref : (TB, Ep, 1)   additive mask per entity (0 or -1e9)
    wq_ref   : (F, F)        Wq^T * (1/sqrt(d))   (scale folded in)
    wk_ref   : (F, F)        Wk^T
    wv_ref   : (F, F)        Wv^T
    wc_ref   : (F, F)        Wc^T
    hsum_ref : (F, F)        block head-sum matrix (1 iff same head)
    selh_ref : (F, H)        per-head extractor (1/d iff f//d == h)
    out_ref  : (TB, W)       lane-dense slab: [ result (F) | attn packed (Ep*H) | 0 ]
    """
    TB, Ep, F = x_ref.shape
    H = selh_ref.shape[1]
    W = out_ref.shape[1]

    ego = ego_ref[...]                                   # (TB, F)
    x = x_ref[...].reshape(TB * Ep, F)                   # free reshape (Ep % 8 == 0)

    # Projections (1/sqrt(d) pre-folded into Wq).
    q = jnp.dot(ego, wq_ref[...], preferred_element_type=jnp.float32)          # (TB, F)
    k = jnp.dot(x, wk_ref[...],
                preferred_element_type=jnp.float32).reshape(TB, Ep, F)          # (TB, Ep, F)
    v = jnp.dot(x, wv_ref[...],
                preferred_element_type=jnp.float32).reshape(TB, Ep, F)          # (TB, Ep, F)

    # Per-head scores expanded onto feature lanes:
    #   s[b, e, f] = sum_{f' in head(f)} q[b, f'] * k[b, e, f']
    qk = q[:, None, :] * k                                                      # (TB, Ep, F)
    s = jnp.dot(qk.reshape(TB * Ep, F), hsum_ref[...],
                preferred_element_type=jnp.float32).reshape(TB, Ep, F)
    s = s + madd_ref[...]                                 # lane-splat of (TB, Ep, 1)

    # Numerically-stable softmax over the entity axis, still F-lane-dense.
    m = jnp.max(s, axis=1)                                # (TB, F)
    e = jnp.exp(s - m[:, None, :])                        # (TB, Ep, F)
    inv = 1.0 / jnp.sum(e, axis=1)                        # (TB, F)  exact recip
    p = e * inv[:, None, :]                               # (TB, Ep, F)

    # Weighted value sum + output combine: (att @ Wc^T + ego) / 2.
    att = jnp.sum(p * v, axis=1)                          # (TB, F)
    res = jnp.dot(att, wc_ref[...], preferred_element_type=jnp.float32)
    res = (res + ego) * 0.5                               # (TB, F)

    parts = [res]
    used = F
    if return_attention:
        # Collapse the d identical lanes of each head to one probability value and
        # pack next to the result so the single output stays lane-dense.
        ph = jnp.dot(p.reshape(TB * Ep, F), selh_ref[...],
                     preferred_element_type=jnp.float32)  # (TB*Ep, H)
        ph = ph.reshape(TB, Ep, H)                        # free reshape
        parts.extend(ph[:, e_idx, :] for e_idx in range(Ep))
        used += Ep * H
    if W > used:
        parts.append(jnp.zeros((TB, W - used), jnp.float32))
    out_ref[...] = jnp.concatenate(parts, axis=-1).astype(out_ref.dtype)


def ego_attention(ego, others, wq, wk, wv, wc, heads, mask=None, *,
                  block_b=512, min_grid_steps=4, return_attention=True):
    """ego: (B, 1, F), others: (B, N, F). Returns (result (B, F), attn (B, H, 1, E))."""
    B, _, F = ego.shape
    N = others.shape[1]
    E = N + 1
    H = heads
    d = F // H

    # ---- one-time host-side weight / selector relayout ----
    scale = 1.0 / float(d) ** 0.5                          # exact 0.25 for d=16
    wq_t = (wq.T * scale).astype(jnp.float32)              # (F, F)
    wk_t = wk.T.astype(jnp.float32)                        # (F, F)
    wv_t = wv.T.astype(jnp.float32)                        # (F, F)
    wc_t = wc.T.astype(jnp.float32)                        # (F, F)
    head_ids = jnp.arange(F, dtype=jnp.int32) // d
    hsum = (head_ids[:, None] == head_ids[None, :]).astype(jnp.float32)        # (F, F)
    selh = ((head_ids[:, None] == jnp.arange(H, dtype=jnp.int32)[None, :])
            .astype(jnp.float32) / float(d))                                   # (F, H)

    # ---- batch tile: as big as possible, but keep >= min_grid_steps grid steps so
    #      both v7x TensorCores get work; entities padded to a multiple of 8 ----
    Ep = _round_up(E, 8)
    Bp0 = _round_up(B, 8)
    TB = min(block_b, Bp0)
    if min_grid_steps > 1:
        TB = min(TB, max(128, _round_up(-(-Bp0 // min_grid_steps), 8)))
    TB = max(TB, 8)
    Bp = _round_up(Bp0, TB)

    # ---- fused entity tensor (entity 0 = ego) + dense ego row for Q / residual ----
    x = jnp.concatenate([ego.reshape(B, 1, F), others], axis=1)                 # (B, E, F)
    x = jnp.pad(x, ((0, Bp - B), (0, Ep - E), (0, 0)))
    ego2 = jnp.pad(ego.reshape(B, F), ((0, Bp - B), (0, 0)))

    # ---- per-entity additive mask (no head broadcast); padded slots masked ----
    if mask is None:
        m2 = jnp.zeros((B, E), dtype=jnp.float32)
    else:
        m2 = mask.reshape(B, E).astype(jnp.float32)
    madd = jnp.pad(m2 * jnp.float32(-1e9), ((0, Bp - B), (0, Ep - E)),
                   constant_values=-1e9)
    madd = madd[:, :, None]                                                     # (Bp, Ep, 1)

    W = _round_up(F + (Ep * H if return_attention else 0), 128)
    grid = (Bp // TB,)

    kernel = functools.partial(ego_attention_kernel,
                               return_attention=return_attention)
    slab = pl.pallas_call(
        kernel,
        out_shape=jax.ShapeDtypeStruct((Bp, W), jnp.float32),
        grid_spec=pltpu.PrefetchScalarGridSpec(
            num_scalar_prefetch=0,
            grid=grid,
            in_specs=[
                pl.BlockSpec((TB, Ep, F), lambda i: (i, 0, 0)),   # fused entities
                pl.BlockSpec((TB, F), lambda i: (i, 0)),          # ego row
                pl.BlockSpec((TB, Ep, 1), lambda i: (i, 0, 0)),   # additive mask
                pl.BlockSpec((F, F), lambda i: (0, 0)),           # Wq^T * scale
                pl.BlockSpec((F, F), lambda i: (0, 0)),           # Wk^T
                pl.BlockSpec((F, F), lambda i: (0, 0)),           # Wv^T
                pl.BlockSpec((F, F), lambda i: (0, 0)),           # Wc^T
                pl.BlockSpec((F, F), lambda i: (0, 0)),           # head-sum matrix
                pl.BlockSpec((F, H), lambda i: (0, 0)),           # head extractor
            ],
            out_specs=pl.BlockSpec((TB, W), lambda i: (i, 0)),
        ),
        compiler_params=pltpu.CompilerParams(
            dimension_semantics=("parallel",),
            vmem_limit_bytes=32 * 1024 * 1024,
        ),
    )(x, ego2, madd, wq_t, wk_t, wv_t, wc_t, hsum, selh)

    result = slab[:B, :F]
    if not return_attention:
        return result, None
    attn = slab[:B, F:F + Ep * H].reshape(B, Ep, H)[:, :E, :]    # (B, E, H)
    attn = jnp.transpose(attn, (0, 2, 1))[:, :, None, :]         # (B, H, 1, E)
    return result, attn


def _reference(ego, others, wq, wk, wv, wc, heads, mask=None):
    """Pure-JAX reference mirroring the PyTorch forward."""
    B, _, F = ego.shape
    E = others.shape[1] + 1
    d = F // heads
    x = jnp.concatenate([ego.reshape(B, 1, F), others], axis=1)
    k = (x @ wk.T).reshape(B, E, heads, d).transpose(0, 2, 1, 3)
    v = (x @ wv.T).reshape(B, E, heads, d).transpose(0, 2, 1, 3)
    q = (ego @ wq.T).reshape(B, 1, heads, d).transpose(0, 2, 1, 3)
    s = jnp.einsum('bhqd,bhkd->bhqk', q, k) / jnp.sqrt(jnp.float32(d))
    if mask is not None:
        s = jnp.where(mask.reshape(B, 1, 1, E).astype(bool), -1e9, s)
    p = jax.nn.softmax(s, axis=-1)
    out = jnp.einsum('bhqk,bhkd->bhqd', p, v).reshape(B, F)
    res = ((out @ wc.T) + ego[:, 0, :]) / 2.0
    return res, p


if __name__ == "__main__":
    # config: feature_size=64, heads=4 (module default)
    F, H = 64, 4
    key = jax.random.PRNGKey(0)
    k0, k1, k2, k3, k4, k5, k6 = jax.random.split(key, 7)

    bound = (6.0 / (F + F)) ** 0.5
    wq = jax.random.uniform(k2, (F, F), jnp.float32, -bound, bound)
    wk = jax.random.uniform(k3, (F, F), jnp.float32, -bound, bound)
    wv = jax.random.uniform(k4, (F, F), jnp.float32, -bound, bound)
    wc = jax.random.uniform(k5, (F, F), jnp.float32, -bound, bound)

    # ---- case 1: B=2, N=7 (E=8, no entity padding) with a mask ----
    B, N = 2, 7
    ego = jax.random.normal(k0, (B, 1, F), dtype=jnp.float32)
    others = jax.random.normal(k1, (B, N, F), dtype=jnp.float32)
    mask = jnp.zeros((B, N + 1), dtype=jnp.float32).at[1, -2:].set(1.0)

    result, attn = ego_attention(ego, others, wq, wk, wv, wc, H, mask=mask)
    result, attn = jax.block_until_ready((result, attn))
    ref_res, ref_attn = _reference(ego, others, wq, wk, wv, wc, H, mask=mask)
    assert result.shape == (B, F) and attn.shape == (B, H, 1, N + 1)
    assert jnp.allclose(result, ref_res, atol=2e-4, rtol=2e-4)
    assert jnp.allclose(attn, ref_attn, atol=2e-4, rtol=1e-3)

    # ---- case 2: B=5, N=3 (exercises batch + entity padding), no mask ----
    B2, N2 = 5, 3
    ego2 = jax.random.normal(k6, (B2, 1, F), dtype=jnp.float32)
    others2 = jax.random.normal(k1, (B2, N2, F), dtype=jnp.float32)
    r2, a2 = ego_attention(ego2, others2, wq, wk, wv, wc, H)
    r2, a2 = jax.block_until_ready((r2, a2))
    rr2, ra2 = _reference(ego2, others2, wq, wk, wv, wc, H)
    assert r2.shape == (B2, F) and a2.shape == (B2, H, 1, N2 + 1)
    assert jnp.allclose(r2, rr2, atol=2e-4, rtol=2e-4)
    assert jnp.allclose(a2, ra2, atol=2e-4, rtol=1e-3)

    # ---- case 3: result-only fast path (skips attention extraction/packing) ----
    r3, a3 = ego_attention(ego2, others2, wq, wk, wv, wc, H,
                           return_attention=False)
    r3 = jax.block_until_ready(r3)
    assert a3 is None
    assert jnp.allclose(r3, rr2, atol=2e-4, rtol=2e-4)

    print("KERNEL_OK")
</pallas_src>

<mosaic_0001>
module attributes {stable_mosaic.version = 11 : i64} {
  func.func @ego_attention_kernel(%arg0: i32, %arg1: memref<8x8x64xf32, #tpu.memory_space<vmem>>, %arg2: memref<8x64xf32, #tpu.memory_space<vmem>>, %arg3: memref<8x8x1xf32, #tpu.memory_space<vmem>>, %arg4: memref<64x64xf32, #tpu.memory_space<vmem>>, %arg5: memref<64x64xf32, #tpu.memory_space<vmem>>, %arg6: memref<64x64xf32, #tpu.memory_space<vmem>>, %arg7: memref<64x64xf32, #tpu.memory_space<vmem>>, %arg8: memref<64x64xf32, #tpu.memory_space<vmem>>, %arg9: memref<64x4xf32, #tpu.memory_space<vmem>>, %arg10: memref<8x128xf32, #tpu.memory_space<vmem>>) attributes {dimension_semantics = [#tpu.dimension_semantics<parallel>], iteration_bounds = array<i64: 1>, scalar_prefetch = 0 : i64, scratch_operands = 0 : i64, tpu.core_type = #tpu.core_type<tc>, window_params = [{transform_indices = @transform_0, window_bounds = array<i64: 8, 8, 64>}, {transform_indices = @transform_1, window_bounds = array<i64: 8, 64>}, {transform_indices = @transform_2, window_bounds = array<i64: 8, 8, 1>}, {pipeline_mode = #tpu.pipeline_mode<synchronous>, transform_indices = @transform_3, window_bounds = array<i64: 64, 64>}, {pipeline_mode = #tpu.pipeline_mode<synchronous>, transform_indices = @transform_4, window_bounds = array<i64: 64, 64>}, {pipeline_mode = #tpu.pipeline_mode<synchronous>, transform_indices = @transform_5, window_bounds = array<i64: 64, 64>}, {pipeline_mode = #tpu.pipeline_mode<synchronous>, transform_indices = @transform_6, window_bounds = array<i64: 64, 64>}, {pipeline_mode = #tpu.pipeline_mode<synchronous>, transform_indices = @transform_7, window_bounds = array<i64: 64, 64>}, {pipeline_mode = #tpu.pipeline_mode<synchronous>, transform_indices = @transform_8, window_bounds = array<i64: 64, 4>}, {transform_indices = @transform_9, window_bounds = array<i64: 8, 128>}]} {
    %c0 = arith.constant 0 : index
    %c0_0 = arith.constant 0 : index
    %0 = vector.load %arg2[%c0, %c0_0] : memref<8x64xf32, #tpu.memory_space<vmem>>, vector<8x64xf32>
    %c0_1 = arith.constant 0 : index
    %c0_2 = arith.constant 0 : index
    %c0_3 = arith.constant 0 : index
    %1 = vector.load %arg1[%c0_1, %c0_2, %c0_3] : memref<8x8x64xf32, #tpu.memory_space<vmem>>, vector<8x8x64xf32>
    %2 = vector.shape_cast %1 : vector<8x8x64xf32> to vector<64x64xf32>
    %c0_4 = arith.constant 0 : index
    %c0_5 = arith.constant 0 : index
    %3 = vector.load %arg4[%c0_4, %c0_5] : memref<64x64xf32, #tpu.memory_space<vmem>>, vector<64x64xf32>
    %cst = arith.constant dense<0.000000e+00> : vector<8x64xf32>
    %4 = tpu.matmul %0, %3, %cst {dimension_numbers = #tpu.dot_dimension_numbers<[1], [0], [0], [1], [0, 0, 1, 1], [], []>} : vector<8x64xf32>, vector<64x64xf32>, vector<8x64xf32> -> vector<8x64xf32>
    %c0_6 = arith.constant 0 : index
    %c0_7 = arith.constant 0 : index
    %5 = vector.load %arg5[%c0_6, %c0_7] : memref<64x64xf32, #tpu.memory_space<vmem>>, vector<64x64xf32>
    %cst_8 = arith.constant dense<0.000000e+00> : vector<64x64xf32>
    %6 = tpu.matmul %2, %5, %cst_8 {dimension_numbers = #tpu.dot_dimension_numbers<[1], [0], [0], [1], [0, 0, 1, 1], [], []>} : vector<64x64xf32>, vector<64x64xf32>, vector<64x64xf32> -> vector<64x64xf32>
    %7 = vector.shape_cast %6 : vector<64x64xf32> to vector<8x8x64xf32>
    %c0_9 = arith.constant 0 : index
    %c0_10 = arith.constant 0 : index
    %8 = vector.load %arg6[%c0_9, %c0_10] : memref<64x64xf32, #tpu.memory_space<vmem>>, vector<64x64xf32>
    %cst_11 = arith.constant dense<0.000000e+00> : vector<64x64xf32>
    %9 = tpu.matmul %2, %8, %cst_11 {dimension_numbers = #tpu.dot_dimension_numbers<[1], [0], [0], [1], [0, 0, 1, 1], [], []>} : vector<64x64xf32>, vector<64x64xf32>, vector<64x64xf32> -> vector<64x64xf32>
    %10 = vector.shape_cast %9 : vector<64x64xf32> to vector<8x8x64xf32>
    %11 = vector.shape_cast %4 : vector<8x64xf32> to vector<8x1x64xf32>
    %12 = vector.broadcast %11 : vector<8x1x64xf32> to vector<8x8x64xf32>
    %13 = arith.mulf %12, %7 : vector<8x8x64xf32>
    %14 = vector.shape_cast %13 : vector<8x8x64xf32> to vector<64x64xf32>
    %c0_12 = arith.constant 0 : index
    %c0_13 = arith.constant 0 : index
    %15 = vector.load %arg8[%c0_12, %c0_13] : memref<64x64xf32, #tpu.memory_space<vmem>>, vector<64x64xf32>
    %cst_14 = arith.constant dense<0.000000e+00> : vector<64x64xf32>
    %16 = tpu.matmul %14, %15, %cst_14 {dimension_numbers = #tpu.dot_dimension_numbers<[1], [0], [0], [1], [0, 0, 1, 1], [], []>} : vector<64x64xf32>, vector<64x64xf32>, vector<64x64xf32> -> vector<64x64xf32>
    %17 = vector.shape_cast %16 : vector<64x64xf32> to vector<8x8x64xf32>
    %c0_15 = arith.constant 0 : index
    %c0_16 = arith.constant 0 : index
    %c0_17 = arith.constant 0 : index
    %18 = vector.load %arg3[%c0_15, %c0_16, %c0_17] : memref<8x8x1xf32, #tpu.memory_space<vmem>>, vector<8x8x1xf32>
    %19 = vector.broadcast %18 : vector<8x8x1xf32> to vector<8x8x64xf32>
    %20 = arith.addf %17, %19 : vector<8x8x64xf32>
    %cst_18 = arith.constant dense<0xFF800000> : vector<8x64xf32>
    %21 = vector.multi_reduction <maximumf>, %20, %cst_18 [1] : vector<8x8x64xf32> to vector<8x64xf32>
    %22 = vector.shape_cast %21 : vector<8x64xf32> to vector<8x1x64xf32>
    %23 = vector.broadcast %22 : vector<8x1x64xf32> to vector<8x8x64xf32>
    %24 = arith.subf %20, %23 : vector<8x8x64xf32>
    %25 = math.exp %24 : vector<8x8x64xf32>
    %cst_19 = arith.constant dense<0.000000e+00> : vector<8x64xf32>
    %26 = vector.multi_reduction <add>, %25, %cst_19 [1] : vector<8x8x64xf32> to vector<8x64xf32>
    %cst_20 = arith.constant 1.000000e+00 : f32
    %27 = vector.broadcast %cst_20 : f32 to vector<8x64xf32>
    %28 = arith.divf %27, %26 : vector<8x64xf32>
    %29 = vector.shape_cast %28 : vector<8x64xf32> to vector<8x1x64xf32>
    %30 = vector.broadcast %29 : vector<8x1x64xf32> to vector<8x8x64xf32>
    %31 = arith.mulf %25, %30 : vector<8x8x64xf32>
    %32 = arith.mulf %31, %10 : vector<8x8x64xf32>
    %cst_21 = arith.constant dense<0.000000e+00> : vector<8x64xf32>
    %33 = vector.multi_reduction <add>, %32, %cst_21 [1] : vector<8x8x64xf32> to vector<8x64xf32>
    %c0_22 = arith.constant 0 : index
    %c0_23 = arith.constant 0 : index
    %34 = vector.load %arg7[%c0_22, %c0_23] : memref<64x64xf32, #tpu.memory_space<vmem>>, vector<64x64xf32>
    %cst_24 = arith.constant dense<0.000000e+00> : vector<8x64xf32>
    %35 = tpu.matmul %33, %34, %cst_24 {dimension_numbers = #tpu.dot_dimension_numbers<[1], [0], [0], [1], [0, 0, 1, 1], [], []>} : vector<8x64xf32>, vector<64x64xf32>, vector<8x64xf32> -> vector<8x64xf32>
    %36 = arith.addf %35, %0 : vector<8x64xf32>
    %cst_25 = arith.constant 5.000000e-01 : f32
    %37 = vector.broadcast %cst_25 : f32 to vector<8x64xf32>
    %38 = arith.mulf %36, %37 : vector<8x64xf32>
    %39 = vector.shape_cast %31 : vector<8x8x64xf32> to vector<64x64xf32>
    %c0_26 = arith.constant 0 : index
    %c0_27 = arith.constant 0 : index
    %40 = vector.load %arg9[%c0_26, %c0_27] : memref<64x4xf32, #tpu.memory_space<vmem>>, vector<64x4xf32>
    %cst_28 = arith.constant dense<0.000000e+00> : vector<64x4xf32>
    %41 = tpu.matmul %39, %40, %cst_28 {dimension_numbers = #tpu.dot_dimension_numbers<[1], [0], [0], [1], [0, 0, 1, 1], [], []>} : vector<64x64xf32>, vector<64x4xf32>, vector<64x4xf32> -> vector<64x4xf32>
    %42 = vector.shape_cast %41 : vector<64x4xf32> to vector<8x8x4xf32>
    %43 = vector.extract_strided_slice %42 {offsets = [0, 0, 0], sizes = [8, 1, 4], strides = [1, 1, 1]} : vector<8x8x4xf32> to vector<8x1x4xf32>
    %44 = vector.shape_cast %43 : vector<8x1x4xf32> to vector<8x4xf32>
    %45 = vector.extract_strided_slice %42 {offsets = [0, 1, 0], sizes = [8, 1, 4], strides = [1, 1, 1]} : vector<8x8x4xf32> to vector<8x1x4xf32>
    %46 = vector.shape_cast %45 : vector<8x1x4xf32> to vector<8x4xf32>
    %47 = vector.extract_strided_slice %42 {offsets = [0, 2, 0], sizes = [8, 1, 4], strides = [1, 1, 1]} : vector<8x8x4xf32> to vector<8x1x4xf32>
    %48 = vector.shape_cast %47 : vector<8x1x4xf32> to vector<8x4xf32>
    %49 = vector.extract_strided_slice %42 {offsets = [0, 3, 0], sizes = [8, 1, 4], strides = [1, 1, 1]} : vector<8x8x4xf32> to vector<8x1x4xf32>
    %50 = vector.shape_cast %49 : vector<8x1x4xf32> to vector<8x4xf32>
    %51 = vector.extract_strided_slice %42 {offsets = [0, 4, 0], sizes = [8, 1, 4], strides = [1, 1, 1]} : vector<8x8x4xf32> to vector<8x1x4xf32>
    %52 = vector.shape_cast %51 : vector<8x1x4xf32> to vector<8x4xf32>
    %53 = vector.extract_strided_slice %42 {offsets = [0, 5, 0], sizes = [8, 1, 4], strides = [1, 1, 1]} : vector<8x8x4xf32> to vector<8x1x4xf32>
    %54 = vector.shape_cast %53 : vector<8x1x4xf32> to vector<8x4xf32>
    %55 = vector.extract_strided_slice %42 {offsets = [0, 6, 0], sizes = [8, 1, 4], strides = [1, 1, 1]} : vector<8x8x4xf32> to vector<8x1x4xf32>
    %56 = vector.shape_cast %55 : vector<8x1x4xf32> to vector<8x4xf32>
    %57 = vector.extract_strided_slice %42 {offsets = [0, 7, 0], sizes = [8, 1, 4], strides = [1, 1, 1]} : vector<8x8x4xf32> to vector<8x1x4xf32>
    %58 = vector.shape_cast %57 : vector<8x1x4xf32> to vector<8x4xf32>
    %cst_29 = arith.constant 0.000000e+00 : f32
    %59 = vector.broadcast %cst_29 : f32 to vector<8x32xf32>
    %60 = tpu.concatenate %38, %44, %46, %48, %50, %52, %54, %56, %58, %59 in 1 : vector<8x64xf32>, vector<8x4xf32>, vector<8x4xf32>, vector<8x4xf32>, vector<8x4xf32>, vector<8x4xf32>, vector<8x4xf32>, vector<8x4xf32>, vector<8x4xf32>, vector<8x32xf32> -> vector<8x128xf32>
    %c0_30 = arith.constant 0 : index
    %c0_31 = arith.constant 0 : index
    %61 = vector.load %arg10[%c0_30, %c0_31] : memref<8x128xf32, #tpu.memory_space<vmem>>, vector<8x128xf32>
    tpu.vector_store %arg10[%c0_30, %c0_31], %60 {strides = array<i32>} : memref<8x128xf32, #tpu.memory_space<vmem>>, vector<8x128xf32>,
    return
  }
  func.func @transform_0(%arg0: i32) -> (i32, i32, i32) {
    %c0_i32 = arith.constant 0 : i32
    %c0_i32_0 = arith.constant 0 : i32
    %c0_i32_1 = arith.constant 0 : i32
    return %arg0, %c0_i32, %c0_i32_0 : i32, i32, i32
  }
  func.func @transform_1(%arg0: i32) -> (i32, i32) {
    %c0_i32 = arith.constant 0 : i32
    %c0_i32_0 = arith.constant 0 : i32
    return %arg0, %c0_i32 : i32, i32
  }
  func.func @transform_2(%arg0: i32) -> (i32, i32, i32) {
    %c0_i32 = arith.constant 0 : i32
    %c0_i32_0 = arith.constant 0 : i32
    %c0_i32_1 = arith.constant 0 : i32
    return %arg0, %c0_i32, %c0_i32_0 : i32, i32, i32
  }
  func.func @transform_3(%arg0: i32) -> (i32, i32) {
    %c0_i32 = arith.constant 0 : i32
    %c0_i32_0 = arith.constant 0 : i32
    %c0_i32_1 = arith.constant 0 : i32
    return %c0_i32, %c0_i32_0 : i32, i32
  }
  func.func @transform_4(%arg0: i32) -> (i32, i32) {
    %c0_i32 = arith.constant 0 : i32
    %c0_i32_0 = arith.constant 0 : i32
    %c0_i32_1 = arith.constant 0 : i32
    return %c0_i32, %c0_i32_0 : i32, i32
  }
  func.func @transform_5(%arg0: i32) -> (i32, i32) {
    %c0_i32 = arith.constant 0 : i32
    %c0_i32_0 = arith.constant 0 : i32
    %c0_i32_1 = arith.constant 0 : i32
    return %c0_i32, %c0_i32_0 : i32, i32
  }
  func.func @transform_6(%arg0: i32) -> (i32, i32) {
    %c0_i32 = arith.constant 0 : i32
    %c0_i32_0 = arith.constant 0 : i32
    %c0_i32_1 = arith.constant 0 : i32
    return %c0_i32, %c0_i32_0 : i32, i32
  }
  func.func @transform_7(%arg0: i32) -> (i32, i32) {
    %c0_i32 = arith.constant 0 : i32
    %c0_i32_0 = arith.constant 0 : i32
    %c0_i32_1 = arith.constant 0 : i32
    return %c0_i32, %c0_i32_0 : i32, i32
  }
  func.func @transform_8(%arg0: i32) -> (i32, i32) {
    %c0_i32 = arith.constant 0 : i32
    %c0_i32_0 = arith.constant 0 : i32
    %c0_i32_1 = arith.constant 0 : i32
    return %c0_i32, %c0_i32_0 : i32, i32
  }
  func.func @transform_9(%arg0: i32) -> (i32, i32) {
    %c0_i32 = arith.constant 0 : i32
    %c0_i32_0 = arith.constant 0 : i32
    return %arg0, %c0_i32 : i32, i32
  }
}

</mosaic_0001>

<llo_original>
// kernel: tpu_custom_call.1
$region0: #{tpu_custom_call.1}
  #allocation0 [shape = 'u32[]', space=smem, size = 0x4, offset = 0x4, fixed_abs, tag = 'smem constant byte address 0x4 - core index']
  #allocation1 [shape = 'u32[72,128]{1,0:T(1,128)}', space=vmem, size = 0x9000, scoped, tag = 'internal scratch']
  %s0 = inlined_call_operand.vmem [shape: f32[8,8,64], index: 0, kind: input, shape index: {}]
  %s1 = inlined_call_operand.vmem [shape: f32[8,64], index: 1, kind: input, shape index: {}]
  %s2 = inlined_call_operand.vmem [shape: f32[8,8,1], index: 2, kind: input, shape index: {}]
  %s3 = inlined_call_operand.vmem [shape: f32[64,64], index: 3, kind: input, shape index: {}]
  %s4 = inlined_call_operand.hbm [shape: f32[64,64], index: 4, kind: input, shape index: {}]
  %s5 = inlined_call_operand.hbm [shape: f32[64,64], index: 5, kind: input, shape index: {}]
  %s6 = inlined_call_operand.hbm [shape: f32[64,64], index: 6, kind: input, shape index: {}]
  %s7 = inlined_call_operand.hbm [shape: f32[64,64], index: 7, kind: input, shape index: {}]
  %s8 = inlined_call_operand.vmem [shape: f32[64,4], index: 8, kind: input, shape index: {}]
  %s9 = inlined_call_operand.hbm [shape: f32[8,128], index: 9, kind: output, shape index: {}]
  %s10 = sld [smem:[#allocation0]]
  $region62: #{tpu_custom_call.1} parent=0
    _
  %s12 = ssub.s32 1, %s10
  %s13 = scalar_select 0, %s12, %s10
  $region1: #{tpu_custom_call.1} parent=0
    #allocation2 [shape = 'u8[32768]{0}', space=vmem, size = 0x8000, scoped, tag = 'input window, operand 4, single buffered']
    #allocation3 [shape = 's32[1]{0}', space=sflag, size = 0x4, scoped, tag = 'scoped memory for tpu_custom_call.1']
    #allocation4 [shape = 's32[1]{0}', space=sflag, size = 0x4, scoped, tag = 'scoped memory for tpu_custom_call.1']
    #allocation5 [shape = 'u8[32768]{0}', space=vmem, size = 0x8000, scoped, tag = 'input window, operand 5, single buffered']
    #allocation6 [shape = 's32[1]{0}', space=sflag, size = 0x4, scoped, tag = 'scoped memory for tpu_custom_call.1']
    #allocation7 [shape = 'u8[32768]{0}', space=vmem, size = 0x8000, scoped, tag = 'input window, operand 6, single buffered']
    #allocation8 [shape = 'u8[32768]{0}', space=vmem, size = 0x8000, scoped, tag = 'input window, operand 7, single buffered']
    #allocation9 [shape = 's32[1]{0}', space=sflag, size = 0x4, scoped, tag = 'scoped memory for tpu_custom_call.1']
    #allocation10 [shape = 'u8[4096]{0}', space=vmem, size = 0x1000, scoped, tag = 'output window, operand 0, single buffered']
    %14 = vsyncpa [#allocation3], 0
    %15 = vsyncpa [#allocation6], 0
    %16 = vsyncpa [#allocation9], 0
    %17 = vsyncpa [#allocation4], 0
    // Predicated region
    $region2: #{tpu_custom_call.1} parent=1 // pred_check
      _
    $region3: #{tpu_custom_call.1} parent=1 // pred_check_branch
      %19 = sbr.rel (0) target = $region5
    $region4: #{tpu_custom_call.1} parent=1 // pred_region
      _
    $region5: #{tpu_custom_call.1} parent=1 // pred_fallthru
      _
    // Predicated region
    $region6: #{tpu_custom_call.1} parent=1 // pred_check
      _
    $region7: #{tpu_custom_call.1} parent=1 // pred_check_branch
      %21 = sbr.rel (0) target = $region9
    $region8: #{tpu_custom_call.1} parent=1 // pred_region
      _
    $region9: #{tpu_custom_call.1} parent=1 // pred_fallthru
      _
    // Predicated region
    $region10: #{tpu_custom_call.1} parent=1 // pred_check
      _
    $region11: #{tpu_custom_call.1} parent=1 // pred_check_branch
      %23 = sbr.rel (0) target = $region13
    $region12: #{tpu_custom_call.1} parent=1 // pred_region
      _
    $region13: #{tpu_custom_call.1} parent=1 // pred_fallthru
      _
    // Predicated region
    $region14: #{tpu_custom_call.1} parent=1 // pred_check
      _
    $region15: #{tpu_custom_call.1} parent=1 // pred_check_branch
      %25 = sbr.rel (0) target = $region17
    $region16: #{tpu_custom_call.1} parent=1 // pred_region
      _
    $region17: #{tpu_custom_call.1} parent=1 // pred_fallthru
      _
    // Predicated region
    $region18: #{tpu_custom_call.1} parent=1 // pred_check
      _
    $region19: #{tpu_custom_call.1} parent=1 // pred_check_branch
      %27 = sbr.rel (0) target = $region21
    $region20: #{tpu_custom_call.1} parent=1 // pred_region
      %29 = vsyncadd [#allocation3], 0
      %s30 = sshll.u32 %s4, 4
      %s31 = int_to_ptr.hbm [resolvable:$true] %s30
      %s32 = sshll.u32 [#allocation2], 4
      %s33 = int_to_ptr.vmem [resolvable:$true] %s32
      %38 = dma.hbm_to_vmem [thread:$0]  %s31, 1024, %s33, [#allocation3], 128, 128, 8
    $region21: #{tpu_custom_call.1} parent=1 // pred_fallthru
      _
    // Predicated region
    $region22: #{tpu_custom_call.1} parent=1 // pred_check
      _
    $region23: #{tpu_custom_call.1} parent=1 // pred_check_branch
      %40 = sbr.rel (0) target = $region25
    $region24: #{tpu_custom_call.1} parent=1 // pred_region
      %42 = vsyncadd [#allocation6], 0
      %s43 = sshll.u32 %s5, 4
      %s44 = int_to_ptr.hbm [resolvable:$true] %s43
      %s45 = sshll.u32 [#allocation5], 4
      %s46 = int_to_ptr.vmem [resolvable:$true] %s45
      %51 = dma.hbm_to_vmem [thread:$0]  %s44, 1024, %s46, [#allocation6], 128, 128, 8
    $region25: #{tpu_custom_call.1} parent=1 // pred_fallthru
      _
    // Predicated region
    $region26: #{tpu_custom_call.1} parent=1 // pred_check
      _
    $region27: #{tpu_custom_call.1} parent=1 // pred_check_branch
      %53 = sbr.rel (0) target = $region29
    $region28: #{tpu_custom_call.1} parent=1 // pred_region
      %55 = vsyncadd [#allocation6], 0
      %s56 = sshll.u32 %s6, 4
      %s57 = int_to_ptr.hbm [resolvable:$true] %s56
      %s58 = sshll.u32 [#allocation7], 4
      %s59 = int_to_ptr.vmem [resolvable:$true] %s58
      %64 = dma.hbm_to_vmem [thread:$0]  %s57, 1024, %s59, [#allocation6], 128, 128, 8
    $region29: #{tpu_custom_call.1} parent=1 // pred_fallthru
      _
    // Predicated region
    $region30: #{tpu_custom_call.1} parent=1 // pred_check
      _
    $region31: #{tpu_custom_call.1} parent=1 // pred_check_branch
      %66 = sbr.rel (0) target = $region33
    $region32: #{tpu_custom_call.1} parent=1 // pred_region
      %68 = vsyncadd [#allocation9], 0
      %s69 = sshll.u32 %s7, 4
      %s70 = int_to_ptr.hbm [resolvable:$true] %s69
      %s71 = sshll.u32 [#allocation8], 4
      %s72 = int_to_ptr.vmem [resolvable:$true] %s71
      %77 = dma.hbm_to_vmem [thread:$0]  %s70, 1024, %s72, [#allocation9], 128, 128, 8
    $region33: #{tpu_custom_call.1} parent=1 // pred_fallthru
      _
    // Predicated region
    $region34: #{tpu_custom_call.1} parent=1 // pred_check
      _
    $region35: #{tpu_custom_call.1} parent=1 // pred_check_branch
      %79 = sbr.rel (0) target = $region37
    $region36: #{tpu_custom_call.1} parent=1 // pred_region
      _
    $region37: #{tpu_custom_call.1} parent=1 // pred_fallthru
      _
    // Predicated region
    $region38: #{tpu_custom_call.1} parent=1 // pred_check
      _
    $region39: #{tpu_custom_call.1} parent=1 // pred_check_branch
      %81 = sbr.rel (0) target = $region41
    $region40: #{tpu_custom_call.1} parent=1 // pred_region
      %83 = dma.done [#allocation3], 1024
    $region41: #{tpu_custom_call.1} parent=1 // pred_fallthru
      _
    // Predicated region
    $region42: #{tpu_custom_call.1} parent=1 // pred_check
      _
    $region43: #{tpu_custom_call.1} parent=1 // pred_check_branch
      %85 = sbr.rel (0) target = $region45
    $region44: #{tpu_custom_call.1} parent=1 // pred_region
      %87 = dma.done [#allocation6], 1024
    $region45: #{tpu_custom_call.1} parent=1 // pred_fallthru
      _
    // Predicated region
    $region46: #{tpu_custom_call.1} parent=1 // pred_check
      _
    $region47: #{tpu_custom_call.1} parent=1 // pred_check_branch
      %89 = sbr.rel (0) target = $region49
    $region48: #{tpu_custom_call.1} parent=1 // pred_region
      %91 = dma.done [#allocation6], 1024
    $region49: #{tpu_custom_call.1} parent=1 // pred_fallthru
      _
    // Predicated region
    $region50: #{tpu_custom_call.1} parent=1 // pred_check
      _
    $region51: #{tpu_custom_call.1} parent=1 // pred_check_branch
      %93 = sbr.rel (0) target = $region53
    $region52: #{tpu_custom_call.1} parent=1 // pred_region
      %95 = dma.done [#allocation9], 1024
    $region53: #{tpu_custom_call.1} parent=1 // pred_fallthru
      _
    %v96 = vld [vmem:[%s1] sm:$0xff]
    %v97 = vld [vmem:[%s0] sm:$0xff]
    %v98 = vld [vmem:[%s0 + $0x8] sm:$0xff]
    %v99 = vld [vmem:[%s0 + $0x10] sm:$0xff]
    %v100 = vld [vmem:[%s0 + $0x18] sm:$0xff]
    %v101 = vld [vmem:[%s0 + $0x20] sm:$0xff]
    %v102 = vld [vmem:[%s0 + $0x28] sm:$0xff]
    %v103 = vld [vmem:[%s0 + $0x30] sm:$0xff]
    %v104 = vld [vmem:[%s0 + $0x38] sm:$0xff]
    %v105 = vld [vmem:[%s3] sm:$0xff]
    %v106 = vld [vmem:[%s3 + $0x8] sm:$0xff]
    %v107 = vld [vmem:[%s3 + $0x10] sm:$0xff]
    %v108 = vld [vmem:[%s3 + $0x18] sm:$0xff]
    %v109 = vld [vmem:[%s3 + $0x20] sm:$0xff]
    %v110 = vld [vmem:[%s3 + $0x28] sm:$0xff]
    %v111 = vld [vmem:[%s3 + $0x30] sm:$0xff]
    %v112 = vld [vmem:[%s3 + $0x38] sm:$0xff]
    %vm113 = vcmask 523264
    %v115 = vsel %vm113, %v96, 0
    %117 = vmatpush.msra.mxu0 0.0
    %118 = vmatpush.msra.mxu0 0.0
    %119 = vmatpush.msra.mxu0 0.0
    %120 = vmatpush.msra.mxu0 0.0
    %121 = vmatpush.msra.mxu0 0.0
    %122 = vmatpush.msra.mxu0 0.0
    %123 = vmatpush.msra.mxu0 0.0
    %124 = vmatpush.msra.mxu0 0.0
    %125 = vmatpush.msra.mxu0 %v112
    %126 = vmatpush.msra.mxu0 %v111
    %127 = vmatpush.msra.mxu0 %v110
    %128 = vmatpush.msra.mxu0 %v109
    %129 = vmatpush.msra.mxu0 %v108
    %130 = vmatpush.msra.mxu0 %v107
    %131 = vmatpush.msra.mxu0 %v106
    %132 = vmatpush.msra.mxu0 %v105
    %133 = vmatmul.f32.gmra.mxu0 %v115
    %v134 = vpop.f32.mrf.mxu0
    %v135 = vadd.f32 0.0, %v134
    %136 = vdwg.mxu0
    %v137 = vld [vmem:[#allocation2] sm:$0xff]
    %v138 = vld [vmem:[#allocation2 + $0x8] sm:$0xff]
    %v139 = vld [vmem:[#allocation2 + $0x10] sm:$0xff]
    %v140 = vld [vmem:[#allocation2 + $0x18] sm:$0xff]
    %v141 = vld [vmem:[#allocation2 + $0x20] sm:$0xff]
    %v142 = vld [vmem:[#allocation2 + $0x28] sm:$0xff]
    %v143 = vld [vmem:[#allocation2 + $0x30] sm:$0xff]
    %v144 = vld [vmem:[#allocation2 + $0x38] sm:$0xff]
    %v146 = vsel %vm113, %v97, 0
    %v149 = vsel %vm113, %v98, 0
    %v152 = vsel %vm113, %v99, 0
    %v155 = vsel %vm113, %v100, 0
    %v158 = vsel %vm113, %v101, 0
    %v161 = vsel %vm113, %v102, 0
    %v164 = vsel %vm113, %v103, 0
    %v167 = vsel %vm113, %v104, 0
    %169 = vmatpush.msra.mxu0 0.0
    %170 = vmatpush.msra.mxu0 0.0
    %171 = vmatpush.msra.mxu0 0.0
    %172 = vmatpush.msra.mxu0 0.0
    %173 = vmatpush.msra.mxu0 0.0
    %174 = vmatpush.msra.mxu0 0.0
    %175 = vmatpush.msra.mxu0 0.0
    %176 = vmatpush.msra.mxu0 0.0
    %177 = vmatpush.msra.mxu0 %v144
    %178 = vmatpush.msra.mxu0 %v143
    %179 = vmatpush.msra.mxu0 %v142
    %180 = vmatpush.msra.mxu0 %v141
    %181 = vmatpush.msra.mxu0 %v140
    %182 = vmatpush.msra.mxu0 %v139
    %183 = vmatpush.msra.mxu0 %v138
    %184 = vmatpush.msra.mxu0 %v137
    %185 = vmatmul.f32.gmra.mxu0 %v146
    %v186 = vpop.f32.mrf.mxu0
    %v187 = vadd.f32 0.0, %v186
    %188 = vmatmul.f32.gmra.mxu0 %v149
    %v189 = vpop.f32.mrf.mxu0
    %v190 = vadd.f32 0.0, %v189
    %191 = vmatmul.f32.gmra.mxu0 %v152
    %v192 = vpop.f32.mrf.mxu0
    %v193 = vadd.f32 0.0, %v192
    %194 = vmatmul.f32.gmra.mxu0 %v155
    %v195 = vpop.f32.mrf.mxu0
    %v196 = vadd.f32 0.0, %v195
    %197 = vmatmul.f32.gmra.mxu0 %v158
    %v198 = vpop.f32.mrf.mxu0
    %v199 = vadd.f32 0.0, %v198
    %200 = vmatmul.f32.gmra.mxu0 %v161
    %v201 = vpop.f32.mrf.mxu0
    %v202 = vadd.f32 0.0, %v201
    %203 = vmatmul.f32.gmra.mxu0 %v164
    %v204 = vpop.f32.mrf.mxu0
    %v205 = vadd.f32 0.0, %v204
    %206 = vmatmul.f32.gmra.mxu0 %v167
    %v207 = vpop.f32.mrf.mxu0
    %v208 = vadd.f32 0.0, %v207
    %209 = vdwg.mxu0
    %v210 = vld [vmem:[#allocation5] sm:$0xff]
    %v211 = vld [vmem:[#allocation5 + $0x8] sm:$0xff]
    %v212 = vld [vmem:[#allocation5 + $0x10] sm:$0xff]
    %v213 = vld [vmem:[#allocation5 + $0x18] sm:$0xff]
    %v214 = vld [vmem:[#allocation5 + $0x20] sm:$0xff]
    %v215 = vld [vmem:[#allocation5 + $0x28] sm:$0xff]
    %v216 = vld [vmem:[#allocation5 + $0x30] sm:$0xff]
    %v217 = vld [vmem:[#allocation5 + $0x38] sm:$0xff]
    %218 = vmatpush.msra.mxu0 0.0
    %219 = vmatpush.msra.mxu0 0.0
    %220 = vmatpush.msra.mxu0 0.0
    %221 = vmatpush.msra.mxu0 0.0
    %222 = vmatpush.msra.mxu0 0.0
    %223 = vmatpush.msra.mxu0 0.0
    %224 = vmatpush.msra.mxu0 0.0
    %225 = vmatpush.msra.mxu0 0.0
    %226 = vmatpush.msra.mxu0 %v217
    %227 = vmatpush.msra.mxu0 %v216
    %228 = vmatpush.msra.mxu0 %v215
    %229 = vmatpush.msra.mxu0 %v214
    %230 = vmatpush.msra.mxu0 %v213
    %231 = vmatpush.msra.mxu0 %v212
    %232 = vmatpush.msra.mxu0 %v211
    %233 = vmatpush.msra.mxu0 %v210
    %234 = vmatmul.f32.gmra.mxu0 %v146
    %v235 = vpop.f32.mrf.mxu0
    %v236 = vadd.f32 0.0, %v235
    %237 = vmatmul.f32.gmra.mxu0 %v149
    %v238 = vpop.f32.mrf.mxu0
    %v239 = vadd.f32 0.0, %v238
    %240 = vmatmul.f32.gmra.mxu0 %v152
    %v241 = vpop.f32.mrf.mxu0
    %v242 = vadd.f32 0.0, %v241
    %243 = vmatmul.f32.gmra.mxu0 %v155
    %v244 = vpop.f32.mrf.mxu0
    %v245 = vadd.f32 0.0, %v244
    %246 = vmatmul.f32.gmra.mxu0 %v158
    %v247 = vpop.f32.mrf.mxu0
    %v248 = vadd.f32 0.0, %v247
    %249 = vmatmul.f32.gmra.mxu0 %v161
    %v250 = vpop.f32.mrf.mxu0
    %v251 = vadd.f32 0.0, %v250
    %252 = vmatmul.f32.gmra.mxu0 %v164
    %v253 = vpop.f32.mrf.mxu0
    %v254 = vadd.f32 0.0, %v253
    %255 = vmatmul.f32.gmra.mxu0 %v167
    %v256 = vpop.f32.mrf.mxu0
    %v257 = vadd.f32 0.0, %v256
    %258 = vdwg.mxu0
    %v260 = vrot.slane %v135, 1
    %v261 = vrot.slane %v135, 2
    %v262 = vrot.slane %v135, 3
    %v263 = vrot.slane %v135, 4
    %v264 = vrot.slane %v135, 5
    %v265 = vrot.slane %v135, 6
    %v266 = vrot.slane %v135, 7
    %v267 = vperm.slane %v135, 0
    %v268 = vperm.slane %v260, 0
    %v269 = vperm.slane %v261, 0
    %v270 = vperm.slane %v262, 0
    %v271 = vperm.slane %v263, 0
    %v272 = vperm.slane %v264, 0
    %v273 = vperm.slane %v265, 0
    %v274 = vperm.slane %v266, 0
    %v283 = vmul.f32 %v267, %v187
    %v284 = vmul.f32 %v268, %v190
    %v285 = vmul.f32 %v269, %v193
    %v286 = vmul.f32 %v270, %v196
    %v287 = vmul.f32 %v271, %v199
    %v288 = vmul.f32 %v272, %v202
    %v289 = vmul.f32 %v273, %v205
    %v290 = vmul.f32 %v274, %v208
    %v291 = vld [vmem:[#allocation8] sm:$0xff]
    %v292 = vld [vmem:[#allocation8 + $0x8] sm:$0xff]
    %v293 = vld [vmem:[#allocation8 + $0x10] sm:$0xff]
    %v294 = vld [vmem:[#allocation8 + $0x18] sm:$0xff]
    %v295 = vld [vmem:[#allocation8 + $0x20] sm:$0xff]
    %v296 = vld [vmem:[#allocation8 + $0x28] sm:$0xff]
    %v297 = vld [vmem:[#allocation8 + $0x30] sm:$0xff]
    %v298 = vld [vmem:[#allocation8 + $0x38] sm:$0xff]
    %v300 = vsel %vm113, %v283, 0
    %v303 = vsel %vm113, %v284, 0
    %v306 = vsel %vm113, %v285, 0
    %v309 = vsel %vm113, %v286, 0
    %v312 = vsel %vm113, %v287, 0
    %v315 = vsel %vm113, %v288, 0
    %v318 = vsel %vm113, %v289, 0
    %v321 = vsel %vm113, %v290, 0
    %323 = vmatpush.msra.mxu0 0.0
    %324 = vmatpush.msra.mxu0 0.0
    %325 = vmatpush.msra.mxu0 0.0
    %326 = vmatpush.msra.mxu0 0.0
    %327 = vmatpush.msra.mxu0 0.0
    %328 = vmatpush.msra.mxu0 0.0
    %329 = vmatpush.msra.mxu0 0.0
    %330 = vmatpush.msra.mxu0 0.0
    %331 = vmatpush.msra.mxu0 %v298
    %332 = vmatpush.msra.mxu0 %v297
    %333 = vmatpush.msra.mxu0 %v296
    %334 = vmatpush.msra.mxu0 %v295
    %335 = vmatpush.msra.mxu0 %v294
    %336 = vmatpush.msra.mxu0 %v293
    %337 = vmatpush.msra.mxu0 %v292
    %338 = vmatpush.msra.mxu0 %v291
    %339 = vmatmul.f32.gmra.mxu0 %v300
    %v340 = vpop.f32.mrf.mxu0
    %v341 = vadd.f32 0.0, %v340
    %342 = vmatmul.f32.gmra.mxu0 %v303
    %v343 = vpop.f32.mrf.mxu0
    %v344 = vadd.f32 0.0, %v343
    %345 = vmatmul.f32.gmra.mxu0 %v306
    %v346 = vpop.f32.mrf.mxu0
    %v347 = vadd.f32 0.0, %v346
    %348 = vmatmul.f32.gmra.mxu0 %v309
    %v349 = vpop.f32.mrf.mxu0
    %v350 = vadd.f32 0.0, %v349
    %351 = vmatmul.f32.gmra.mxu0 %v312
    %v352 = vpop.f32.mrf.mxu0
    %v353 = vadd.f32 0.0, %v352
    %354 = vmatmul.f32.gmra.mxu0 %v315
    %v355 = vpop.f32.mrf.mxu0
    %v356 = vadd.f32 0.0, %v355
    %357 = vmatmul.f32.gmra.mxu0 %v318
    %v358 = vpop.f32.mrf.mxu0
    %v359 = vadd.f32 0.0, %v358
    %360 = vmatmul.f32.gmra.mxu0 %v321
    %v361 = vpop.f32.mrf.mxu0
    %v362 = vadd.f32 0.0, %v361
    %363 = vdwg.mxu0
    %v364 = vld [vmem:[%s2] sm:$0xff]
    %v365 = vld [vmem:[%s2 + $0x8] sm:$0xff]
    %v366 = vld [vmem:[%s2 + $0x10] sm:$0xff]
    %v367 = vld [vmem:[%s2 + $0x18] sm:$0xff]
    %v368 = vld [vmem:[%s2 + $0x20] sm:$0xff]
    %v369 = vld [vmem:[%s2 + $0x28] sm:$0xff]
    %v370 = vld [vmem:[%s2 + $0x30] sm:$0xff]
    %v371 = vld [vmem:[%s2 + $0x38] sm:$0xff]
    %373 = vset.pattern.permute.xlu0 0
    %374 = vperm.xlu0 %373, %v364
    %v375 = vpop.permute.xlu0 %374
    %378 = vset.pattern.permute.xlu0 0
    %379 = vperm.xlu0 %378, %v365
    %v380 = vpop.permute.xlu0 %379
    %383 = vset.pattern.permute.xlu0 0
    %384 = vperm.xlu0 %383, %v366
    %v385 = vpop.permute.xlu0 %384
    %388 = vset.pattern.permute.xlu0 0
    %389 = vperm.xlu0 %388, %v367
    %v390 = vpop.permute.xlu0 %389
    %393 = vset.pattern.permute.xlu0 0
    %394 = vperm.xlu0 %393, %v368
    %v395 = vpop.permute.xlu0 %394
    %398 = vset.pattern.permute.xlu0 0
    %399 = vperm.xlu0 %398, %v369
    %v400 = vpop.permute.xlu0 %399
    %403 = vset.pattern.permute.xlu0 0
    %404 = vperm.xlu0 %403, %v370
    %v405 = vpop.permute.xlu0 %404
    %408 = vset.pattern.permute.xlu0 0
    %409 = vperm.xlu0 %408, %v371
    %v410 = vpop.permute.xlu0 %409
    %v412 = vadd.f32 %v341, %v375
    %v413 = vadd.f32 %v344, %v380
    %v414 = vadd.f32 %v347, %v385
    %v415 = vadd.f32 %v350, %v390
    %v416 = vadd.f32 %v353, %v395
    %v417 = vadd.f32 %v356, %v400
    %v418 = vadd.f32 %v359, %v405
    %v419 = vadd.f32 %v362, %v410
    %v420 = vsel %vm113, %v412, -inf
    %v421 = vrot.slane %v420, 4
    %v422 = vmax.f32 %v420, %v421
    %v423 = vrot.slane %v422, 2
    %v424 = vmax.f32 %v422, %v423
    %v425 = vrot.slane %v424, 1
    %v426 = vmax.f32 %v424, %v425
    %v427 = vsel %vm113, %v413, -inf
    %v428 = vrot.slane %v427, 4
    %v429 = vmax.f32 %v427, %v428
    %v430 = vrot.slane %v429, 2
    %v431 = vmax.f32 %v429, %v430
    %v432 = vrot.slane %v431, 1
    %v433 = vmax.f32 %v431, %v432
    %v434 = vsel %vm113, %v414, -inf
    %v435 = vrot.slane %v434, 4
    %v436 = vmax.f32 %v434, %v435
    %v437 = vrot.slane %v436, 2
    %v438 = vmax.f32 %v436, %v437
    %v439 = vrot.slane %v438, 1
    %v440 = vmax.f32 %v438, %v439
    %v441 = vsel %vm113, %v415, -inf
    %v442 = vrot.slane %v441, 4
    %v443 = vmax.f32 %v441, %v442
    %v444 = vrot.slane %v443, 2
    %v445 = vmax.f32 %v443, %v444
    %v446 = vrot.slane %v445, 1
    %v447 = vmax.f32 %v445, %v446
    %v448 = vsel %vm113, %v416, -inf
    %v449 = vrot.slane %v448, 4
    %v450 = vmax.f32 %v448, %v449
    %v451 = vrot.slane %v450, 2
    %v452 = vmax.f32 %v450, %v451
    %v453 = vrot.slane %v452, 1
    %v454 = vmax.f32 %v452, %v453
    %v455 = vsel %vm113, %v417, -inf
    %v456 = vrot.slane %v455, 4
    %v457 = vmax.f32 %v455, %v456
    %v458 = vrot.slane %v457, 2
    %v459 = vmax.f32 %v457, %v458
    %v460 = vrot.slane %v459, 1
    %v461 = vmax.f32 %v459, %v460
    %v462 = vsel %vm113, %v418, -inf
    %v463 = vrot.slane %v462, 4
    %v464 = vmax.f32 %v462, %v463
    %v465 = vrot.slane %v464, 2
    %v466 = vmax.f32 %v464, %v465
    %v467 = vrot.slane %v466, 1
    %v468 = vmax.f32 %v466, %v467
    %v469 = vsel %vm113, %v419, -inf
    %v470 = vrot.slane %v469, 4
    %v471 = vmax.f32 %v469, %v470
    %v472 = vrot.slane %v471, 2
    %v473 = vmax.f32 %v471, %v472
    %v474 = vrot.slane %v473, 1
    %v475 = vmax.f32 %v473, %v474
    %v476 = vsub.f32 %v412, %v426
    %v477 = vsub.f32 %v413, %v433
    %v478 = vsub.f32 %v414, %v440
    %v479 = vsub.f32 %v415, %v447
    %v480 = vsub.f32 %v416, %v454
    %v481 = vsub.f32 %v417, %v461
    %v482 = vsub.f32 %v418, %v468
    %v483 = vsub.f32 %v419, %v475
    %v484 = vmul.f32 %v476, 1.442695
    %v485 = vpow.pop %v484
    %v486 = vmul.f32 %v477, 1.442695
    %v487 = vpow.pop %v486
    %v488 = vmul.f32 %v478, 1.442695
    %v489 = vpow.pop %v488
    %v490 = vmul.f32 %v479, 1.442695
    %v491 = vpow.pop %v490
    %v492 = vmul.f32 %v480, 1.442695
    %v493 = vpow.pop %v492
    %v494 = vmul.f32 %v481, 1.442695
    %v495 = vpow.pop %v494
    %v496 = vmul.f32 %v482, 1.442695
    %v497 = vpow.pop %v496
    %v498 = vmul.f32 %v483, 1.442695
    %v499 = vpow.pop %v498
    %v500 = vsel %vm113, %v485, 0.0
    %v501 = vrot.slane %v500, 4
    %v502 = vadd.f32 %v500, %v501
    %v503 = vrot.slane %v502, 2
    %v504 = vadd.f32 %v502, %v503
    %v505 = vrot.slane %v504, 1
    %v506 = vadd.f32 %v504, %v505
    %v507 = vsel %vm113, %v487, 0.0
    %v508 = vrot.slane %v507, 4
    %v509 = vadd.f32 %v507, %v508
    %v510 = vrot.slane %v509, 2
    %v511 = vadd.f32 %v509, %v510
    %v512 = vrot.slane %v511, 1
    %v513 = vadd.f32 %v511, %v512
    %v514 = vsel %vm113, %v489, 0.0
    %v515 = vrot.slane %v514, 4
    %v516 = vadd.f32 %v514, %v515
    %v517 = vrot.slane %v516, 2
    %v518 = vadd.f32 %v516, %v517
    %v519 = vrot.slane %v518, 1
    %v520 = vadd.f32 %v518, %v519
    %v521 = vsel %vm113, %v491, 0.0
    %v522 = vrot.slane %v521, 4
    %v523 = vadd.f32 %v521, %v522
    %v524 = vrot.slane %v523, 2
    %v525 = vadd.f32 %v523, %v524
    %v526 = vrot.slane %v525, 1
    %v527 = vadd.f32 %v525, %v526
    %v528 = vsel %vm113, %v493, 0.0
    %v529 = vrot.slane %v528, 4
    %v530 = vadd.f32 %v528, %v529
    %v531 = vrot.slane %v530, 2
    %v532 = vadd.f32 %v530, %v531
    %v533 = vrot.slane %v532, 1
    %v534 = vadd.f32 %v532, %v533
    %v535 = vsel %vm113, %v495, 0.0
    %v536 = vrot.slane %v535, 4
    %v537 = vadd.f32 %v535, %v536
    %v538 = vrot.slane %v537, 2
    %v539 = vadd.f32 %v537, %v538
    %v540 = vrot.slane %v539, 1
    %v541 = vadd.f32 %v539, %v540
    %v542 = vsel %vm113, %v497, 0.0
    %v543 = vrot.slane %v542, 4
    %v544 = vadd.f32 %v542, %v543
    %v545 = vrot.slane %v544, 2
    %v546 = vadd.f32 %v544, %v545
    %v547 = vrot.slane %v546, 1
    %v548 = vadd.f32 %v546, %v547
    %v549 = vsel %vm113, %v499, 0.0
    %v550 = vrot.slane %v549, 4
    %v551 = vadd.f32 %v549, %v550
    %v552 = vrot.slane %v551, 2
    %v553 = vadd.f32 %v551, %v552
    %v554 = vrot.slane %v553, 1
    %v555 = vadd.f32 %v553, %v554
    %v556 = vrcp.pop %v506
    %v557 = vmul.f32 %v506, %v556
    %v558 = vsub.f32 1.0, %v557
    %v559 = vmul.f32 %v556, %v558
    %v560 = vadd.f32 %v556, %v559
    %vm561 = vweird.f32 %v506
    %vm562 = vweird.f32 %v556
    %vm563 = vmor %vm561, %vm562
    %v564 = vsel %vm563, %v556, %v560
    %v565 = vand.u32 2147483647, %v506
    %vm566 = vcmp.eq.f32.partialorder %v565, 8.507059e+37
    %v567 = vand.u32 %v506, 2147483648
    %v568 = vor.u32 1.1754944e-38, %v567
    %v569 = vsel %vm566, %v568, %v564
    %v570 = vmul.f32 1.0, %v569
    %v571 = vrcp.pop %v513
    %v572 = vmul.f32 %v513, %v571
    %v573 = vsub.f32 1.0, %v572
    %v574 = vmul.f32 %v571, %v573
    %v575 = vadd.f32 %v571, %v574
    %vm576 = vweird.f32 %v513
    %vm577 = vweird.f32 %v571
    %vm578 = vmor %vm576, %vm577
    %v579 = vsel %vm578, %v571, %v575
    %v580 = vand.u32 2147483647, %v513
    %vm581 = vcmp.eq.f32.partialorder %v580, 8.507059e+37
    %v582 = vand.u32 %v513, 2147483648
    %v583 = vor.u32 1.1754944e-38, %v582
    %v584 = vsel %vm581, %v583, %v579
    %v585 = vmul.f32 1.0, %v584
    %v586 = vrcp.pop %v520
    %v587 = vmul.f32 %v520, %v586
    %v588 = vsub.f32 1.0, %v587
    %v589 = vmul.f32 %v586, %v588
    %v590 = vadd.f32 %v586, %v589
    %vm591 = vweird.f32 %v520
    %vm592 = vweird.f32 %v586
    %vm593 = vmor %vm591, %vm592
    %v594 = vsel %vm593, %v586, %v590
    %v595 = vand.u32 2147483647, %v520
    %vm596 = vcmp.eq.f32.partialorder %v595, 8.507059e+37
    %v597 = vand.u32 %v520, 2147483648
    %v598 = vor.u32 1.1754944e-38, %v597
    %v599 = vsel %vm596, %v598, %v594
    %v600 = vmul.f32 1.0, %v599
    %v601 = vrcp.pop %v527
    %v602 = vmul.f32 %v527, %v601
    %v603 = vsub.f32 1.0, %v602
    %v604 = vmul.f32 %v601, %v603
    %v605 = vadd.f32 %v601, %v604
    %vm606 = vweird.f32 %v527
    %vm607 = vweird.f32 %v601
    %vm608 = vmor %vm606, %vm607
    %v609 = vsel %vm608, %v601, %v605
    %v610 = vand.u32 2147483647, %v527
    %vm611 = vcmp.eq.f32.partialorder %v610, 8.507059e+37
    %v612 = vand.u32 %v527, 2147483648
    %v613 = vor.u32 1.1754944e-38, %v612
    %v614 = vsel %vm611, %v613, %v609
    %v615 = vmul.f32 1.0, %v614
    %v616 = vrcp.pop %v534
    %v617 = vmul.f32 %v534, %v616
    %v618 = vsub.f32 1.0, %v617
    %v619 = vmul.f32 %v616, %v618
    %v620 = vadd.f32 %v616, %v619
    %vm621 = vweird.f32 %v534
    %vm622 = vweird.f32 %v616
    %vm623 = vmor %vm621, %vm622
    %v624 = vsel %vm623, %v616, %v620
    %v625 = vand.u32 2147483647, %v534
    %vm626 = vcmp.eq.f32.partialorder %v625, 8.507059e+37
    %v627 = vand.u32 %v534, 2147483648
    %v628 = vor.u32 1.1754944e-38, %v627
    %v629 = vsel %vm626, %v628, %v624
    %v630 = vmul.f32 1.0, %v629
    %v631 = vrcp.pop %v541
    %v632 = vmul.f32 %v541, %v631
    %v633 = vsub.f32 1.0, %v632
    %v634 = vmul.f32 %v631, %v633
    %v635 = vadd.f32 %v631, %v634
    %vm636 = vweird.f32 %v541
    %vm637 = vweird.f32 %v631
    %vm638 = vmor %vm636, %vm637
    %v639 = vsel %vm638, %v631, %v635
    %v640 = vand.u32 2147483647, %v541
    %vm641 = vcmp.eq.f32.partialorder %v640, 8.507059e+37
    %v642 = vand.u32 %v541, 2147483648
    %v643 = vor.u32 1.1754944e-38, %v642
    %v644 = vsel %vm641, %v643, %v639
    %v645 = vmul.f32 1.0, %v644
    %v646 = vrcp.pop %v548
    %v647 = vmul.f32 %v548, %v646
    %v648 = vsub.f32 1.0, %v647
    %v649 = vmul.f32 %v646, %v648
    %v650 = vadd.f32 %v646, %v649
    %vm651 = vweird.f32 %v548
    %vm652 = vweird.f32 %v646
    %vm653 = vmor %vm651, %vm652
    %v654 = vsel %vm653, %v646, %v650
    %v655 = vand.u32 2147483647, %v548
    %vm656 = vcmp.eq.f32.partialorder %v655, 8.507059e+37
    %v657 = vand.u32 %v548, 2147483648
    %v658 = vor.u32 1.1754944e-38, %v657
    %v659 = vsel %vm656, %v658, %v654
    %v660 = vmul.f32 1.0, %v659
    %v661 = vrcp.pop %v555
    %v662 = vmul.f32 %v555, %v661
    %v663 = vsub.f32 1.0, %v662
    %v664 = vmul.f32 %v661, %v663
    %v665 = vadd.f32 %v661, %v664
    %vm666 = vweird.f32 %v555
    %vm667 = vweird.f32 %v661
    %vm668 = vmor %vm666, %vm667
    %v669 = vsel %vm668, %v661, %v665
    %v670 = vand.u32 2147483647, %v555
    %vm671 = vcmp.eq.f32.partialorder %v670, 8.507059e+37
    %v672 = vand.u32 %v555, 2147483648
    %v673 = vor.u32 1.1754944e-38, %v672
    %v674 = vsel %vm671, %v673, %v669
    %v675 = vmul.f32 1.0, %v674
    %v676 = vmul.f32 %v485, %v570
    %v677 = vmul.f32 %v487, %v585
    %v678 = vmul.f32 %v489, %v600
    %v679 = vmul.f32 %v491, %v615
    %v680 = vmul.f32 %v493, %v630
    %v681 = vmul.f32 %v495, %v645
    %v682 = vmul.f32 %v497, %v660
    %v683 = vmul.f32 %v499, %v675
    %v684 = vmul.f32 %v676, %v236
    %v685 = vmul.f32 %v677, %v239
    %v686 = vmul.f32 %v678, %v242
    %v687 = vmul.f32 %v679, %v245
    %v688 = vmul.f32 %v680, %v248
    %v689 = vmul.f32 %v681, %v251
    %v690 = vmul.f32 %v682, %v254
    %v691 = vmul.f32 %v683, %v257
    %v692 = vsel %vm113, %v684, 0.0
    %v693 = vrot.slane %v692, 4
    %v694 = vadd.f32 %v692, %v693
    %v695 = vrot.slane %v694, 2
    %v696 = vadd.f32 %v694, %v695
    %v697 = vrot.slane %v696, 1
    %v698 = vadd.f32 %v696, %v697
    %v699 = vsel %vm113, %v685, 0.0
    %v700 = vrot.slane %v699, 4
    %v701 = vadd.f32 %v699, %v700
    %v702 = vrot.slane %v701, 2
    %v703 = vadd.f32 %v701, %v702
    %v704 = vrot.slane %v703, 1
    %v705 = vadd.f32 %v703, %v704
    %v706 = vsel %vm113, %v686, 0.0
    %v707 = vrot.slane %v706, 4
    %v708 = vadd.f32 %v706, %v707
    %v709 = vrot.slane %v708, 2
    %v710 = vadd.f32 %v708, %v709
    %v711 = vrot.slane %v710, 1
    %v712 = vadd.f32 %v710, %v711
    %v713 = vsel %vm113, %v687, 0.0
    %v714 = vrot.slane %v713, 4
    %v715 = vadd.f32 %v713, %v714
    %v716 = vrot.slane %v715, 2
    %v717 = vadd.f32 %v715, %v716
    %v718 = vrot.slane %v717, 1
    %v719 = vadd.f32 %v717, %v718
    %v720 = vsel %vm113, %v688, 0.0
    %v721 = vrot.slane %v720, 4
    %v722 = vadd.f32 %v720, %v721
    %v723 = vrot.slane %v722, 2
    %v724 = vadd.f32 %v722, %v723
    %v725 = vrot.slane %v724, 1
    %v726 = vadd.f32 %v724, %v725
    %v727 = vsel %vm113, %v689, 0.0
    %v728 = vrot.slane %v727, 4
    %v729 = vadd.f32 %v727, %v728
    %v730 = vrot.slane %v729, 2
    %v731 = vadd.f32 %v729, %v730
    %v732 = vrot.slane %v731, 1
    %v733 = vadd.f32 %v731, %v732
    %v734 = vsel %vm113, %v690, 0.0
    %v735 = vrot.slane %v734, 4
    %v736 = vadd.f32 %v734, %v735
    %v737 = vrot.slane %v736, 2
    %v738 = vadd.f32 %v736, %v737
    %v739 = vrot.slane %v738, 1
    %v740 = vadd.f32 %v738, %v739
    %v741 = vsel %vm113, %v691, 0.0
    %v742 = vrot.slane %v741, 4
    %v743 = vadd.f32 %v741, %v742
    %v744 = vrot.slane %v743, 2
    %v745 = vadd.f32 %v743, %v744
    %v746 = vrot.slane %v745, 1
    %v747 = vadd.f32 %v745, %v746
    %v748 = vld [vmem:[#allocation7] sm:$0xff]
    %v749 = vld [vmem:[#allocation7 + $0x8] sm:$0xff]
    %v750 = vld [vmem:[#allocation7 + $0x10] sm:$0xff]
    %v751 = vld [vmem:[#allocation7 + $0x18] sm:$0xff]
    %v752 = vld [vmem:[#allocation7 + $0x20] sm:$0xff]
    %v753 = vld [vmem:[#allocation7 + $0x28] sm:$0xff]
    %v754 = vld [vmem:[#allocation7 + $0x30] sm:$0xff]
    %v755 = vld [vmem:[#allocation7 + $0x38] sm:$0xff]
    %vm764 = vcmask 1041409
    %v765 = vsel %vm764, %v705, %v698
    %vm766 = vcmask 1042434
    %v767 = vsel %vm766, %v712, %v765
    %vm768 = vcmask 1043459
    %v769 = vsel %vm768, %v719, %v767
    %vm770 = vcmask 1044484
    %v771 = vsel %vm770, %v726, %v769
    %vm772 = vcmask 1045509
    %v773 = vsel %vm772, %v733, %v771
    %vm774 = vcmask 1046534
    %v775 = vsel %vm774, %v740, %v773
    %vm776 = vcmask 1047559
    %v777 = vsel %vm776, %v747, %v775
    %v778 = vsel %vm113, %v777, 0
    %780 = vmatpush.msra.mxu0 0.0
    %781 = vmatpush.msra.mxu0 0.0
    %782 = vmatpush.msra.mxu0 0.0
    %783 = vmatpush.msra.mxu0 0.0
    %784 = vmatpush.msra.mxu0 0.0
    %785 = vmatpush.msra.mxu0 0.0
    %786 = vmatpush.msra.mxu0 0.0
    %787 = vmatpush.msra.mxu0 0.0
    %788 = vmatpush.msra.mxu0 %v755
    %789 = vmatpush.msra.mxu0 %v754
    %790 = vmatpush.msra.mxu0 %v753
    %791 = vmatpush.msra.mxu0 %v752
    %792 = vmatpush.msra.mxu0 %v751
    %793 = vmatpush.msra.mxu0 %v750
    %794 = vmatpush.msra.mxu0 %v749
    %795 = vmatpush.msra.mxu0 %v748
    %796 = vmatmul.f32.gmra.mxu0 %v778
    %v797 = vpop.f32.mrf.mxu0
    %v798 = vadd.f32 %v96, %v797
    %799 = vdwg.mxu0
    %v800 = vmul.f32 %v798, 0.5
    %v801 = vld [vmem:[%s8] sm:$0xff]
    %v802 = vld [vmem:[%s8 + $0x8] sm:$0xff]
    %v803 = vld [vmem:[%s8 + $0x10] sm:$0xff]
    %v804 = vld [vmem:[%s8 + $0x18] sm:$0xff]
    %v805 = vld [vmem:[%s8 + $0x20] sm:$0xff]
    %v806 = vld [vmem:[%s8 + $0x28] sm:$0xff]
    %v807 = vld [vmem:[%s8 + $0x30] sm:$0xff]
    %v808 = vld [vmem:[%s8 + $0x38] sm:$0xff]
    %v810 = vsel %vm113, %v676, 0
    %v813 = vsel %vm113, %v677, 0
    %v816 = vsel %vm113, %v678, 0
    %v819 = vsel %vm113, %v679, 0
    %v822 = vsel %vm113, %v680, 0
    %v825 = vsel %vm113, %v681, 0
    %v828 = vsel %vm113, %v682, 0
    %v831 = vsel %vm113, %v683, 0
    %833 = vmatpush.msra.mxu0 0.0
    %834 = vmatpush.msra.mxu0 0.0
    %835 = vmatpush.msra.mxu0 0.0
    %836 = vmatpush.msra.mxu0 0.0
    %837 = vmatpush.msra.mxu0 0.0
    %838 = vmatpush.msra.mxu0 0.0
    %839 = vmatpush.msra.mxu0 0.0
    %840 = vmatpush.msra.mxu0 0.0
    %841 = vmatpush.msra.mxu0 %v808
    %842 = vmatpush.msra.mxu0 %v807
    %843 = vmatpush.msra.mxu0 %v806
    %844 = vmatpush.msra.mxu0 %v805
    %845 = vmatpush.msra.mxu0 %v804
    %846 = vmatpush.msra.mxu0 %v803
    %847 = vmatpush.msra.mxu0 %v802
    %848 = vmatpush.msra.mxu0 %v801
    %849 = vmatmul.f32.gmra.mxu0 %v810
    %v850 = vpop.f32.mrf.mxu0
    %v851 = vadd.f32 0.0, %v850
    %852 = vmatmul.f32.gmra.mxu0 %v813
    %v853 = vpop.f32.mrf.mxu0
    %v854 = vadd.f32 0.0, %v853
    %855 = vmatmul.f32.gmra.mxu0 %v816
    %v856 = vpop.f32.mrf.mxu0
    %v857 = vadd.f32 0.0, %v856
    %858 = vmatmul.f32.gmra.mxu0 %v819
    %v859 = vpop.f32.mrf.mxu0
    %v860 = vadd.f32 0.0, %v859
    %861 = vmatmul.f32.gmra.mxu0 %v822
    %v862 = vpop.f32.mrf.mxu0
    %v863 = vadd.f32 0.0, %v862
    %864 = vmatmul.f32.gmra.mxu0 %v825
    %v865 = vpop.f32.mrf.mxu0
    %v866 = vadd.f32 0.0, %v865
    %867 = vmatmul.f32.gmra.mxu0 %v828
    %v868 = vpop.f32.mrf.mxu0
    %v869 = vadd.f32 0.0, %v868
    %870 = vmatmul.f32.gmra.mxu0 %v831
    %v871 = vpop.f32.mrf.mxu0
    %v872 = vadd.f32 0.0, %v871
    %873 = vdwg.mxu0
    %v882 = vrot.slane %v854, 7
    %v883 = vsel %vm764, %v882, %v851
    %v884 = vrot.slane %v857, 6
    %v885 = vsel %vm766, %v884, %v883
    %v886 = vrot.slane %v860, 5
    %v887 = vsel %vm768, %v886, %v885
    %v888 = vrot.slane %v863, 4
    %v889 = vsel %vm770, %v888, %v887
    %v890 = vrot.slane %v866, 3
    %v891 = vsel %vm772, %v890, %v889
    %v892 = vrot.slane %v869, 2
    %v893 = vsel %vm774, %v892, %v891
    %v894 = vrot.slane %v872, 1
    %v895 = vsel %vm776, %v894, %v893
    %896 = vrot.lane.b32.xlu0 %v895, 64
    %v897 = vpop.permute.xlu0 %896
    %v899 = vrot.slane %v851, 1
    %v900 = vsel %vm764, %v854, %v899
    %v901 = vrot.slane %v857, 7
    %v902 = vsel %vm766, %v901, %v900
    %v903 = vrot.slane %v860, 6
    %v904 = vsel %vm768, %v903, %v902
    %v905 = vrot.slane %v863, 5
    %v906 = vsel %vm770, %v905, %v904
    %v907 = vrot.slane %v866, 4
    %v908 = vsel %vm772, %v907, %v906
    %v909 = vrot.slane %v869, 3
    %v910 = vsel %vm774, %v909, %v908
    %v911 = vrot.slane %v872, 2
    %v912 = vsel %vm776, %v911, %v910
    %913 = vrot.lane.b32.xlu0 %v912, 68
    %v914 = vpop.permute.xlu0 %913
    %v916 = vrot.slane %v851, 2
    %v917 = vrot.slane %v854, 1
    %v918 = vsel %vm764, %v917, %v916
    %v919 = vsel %vm766, %v857, %v918
    %v920 = vrot.slane %v860, 7
    %v921 = vsel %vm768, %v920, %v919
    %v922 = vrot.slane %v863, 6
    %v923 = vsel %vm770, %v922, %v921
    %v924 = vrot.slane %v866, 5
    %v925 = vsel %vm772, %v924, %v923
    %v926 = vrot.slane %v869, 4
    %v927 = vsel %vm774, %v926, %v925
    %v928 = vrot.slane %v872, 3
    %v929 = vsel %vm776, %v928, %v927
    %930 = vrot.lane.b32.xlu0 %v929, 72
    %v931 = vpop.permute.xlu0 %930
    %v933 = vrot.slane %v851, 3
    %v934 = vrot.slane %v854, 2
    %v935 = vsel %vm764, %v934, %v933
    %v936 = vrot.slane %v857, 1
    %v937 = vsel %vm766, %v936, %v935
    %v938 = vsel %vm768, %v860, %v937
    %v939 = vrot.slane %v863, 7
    %v940 = vsel %vm770, %v939, %v938
    %v941 = vrot.slane %v866, 6
    %v942 = vsel %vm772, %v941, %v940
    %v943 = vrot.slane %v869, 5
    %v944 = vsel %vm774, %v943, %v942
    %v945 = vrot.slane %v872, 4
    %v946 = vsel %vm776, %v945, %v944
    %947 = vrot.lane.b32.xlu0 %v946, 76
    %v948 = vpop.permute.xlu0 %947
    %v950 = vrot.slane %v851, 4
    %v951 = vrot.slane %v854, 3
    %v952 = vsel %vm764, %v951, %v950
    %v953 = vrot.slane %v857, 2
    %v954 = vsel %vm766, %v953, %v952
    %v955 = vrot.slane %v860, 1
    %v956 = vsel %vm768, %v955, %v954
    %v957 = vsel %vm770, %v863, %v956
    %v958 = vrot.slane %v866, 7
    %v959 = vsel %vm772, %v958, %v957
    %v960 = vrot.slane %v869, 6
    %v961 = vsel %vm774, %v960, %v959
    %v962 = vrot.slane %v872, 5
    %v963 = vsel %vm776, %v962, %v961
    %964 = vrot.lane.b32.xlu0 %v963, 80
    %v965 = vpop.permute.xlu0 %964
    %v967 = vrot.slane %v851, 5
    %v968 = vrot.slane %v854, 4
    %v969 = vsel %vm764, %v968, %v967
    %v970 = vrot.slane %v857, 3
    %v971 = vsel %vm766, %v970, %v969
    %v972 = vrot.slane %v860, 2
    %v973 = vsel %vm768, %v972, %v971
    %v974 = vrot.slane %v863, 1
    %v975 = vsel %vm770, %v974, %v973
    %v976 = vsel %vm772, %v866, %v975
    %v977 = vrot.slane %v869, 7
    %v978 = vsel %vm774, %v977, %v976
    %v979 = vrot.slane %v872, 6
    %v980 = vsel %vm776, %v979, %v978
    %981 = vrot.lane.b32.xlu0 %v980, 84
    %v982 = vpop.permute.xlu0 %981
    %v984 = vrot.slane %v851, 6
    %v985 = vrot.slane %v854, 5
    %v986 = vsel %vm764, %v985, %v984
    %v987 = vrot.slane %v857, 4
    %v988 = vsel %vm766, %v987, %v986
    %v989 = vrot.slane %v860, 3
    %v990 = vsel %vm768, %v989, %v988
    %v991 = vrot.slane %v863, 2
    %v992 = vsel %vm770, %v991, %v990
    %v993 = vrot.slane %v866, 1
    %v994 = vsel %vm772, %v993, %v992
    %v995 = vsel %vm774, %v869, %v994
    %v996 = vrot.slane %v872, 7
    %v997 = vsel %vm776, %v996, %v995
    %998 = vrot.lane.b32.xlu0 %v997, 88
    %v999 = vpop.permute.xlu0 %998
    %v1001 = vrot.slane %v851, 7
    %v1002 = vrot.slane %v854, 6
    %v1003 = vsel %vm764, %v1002, %v1001
    %v1004 = vrot.slane %v857, 5
    %v1005 = vsel %vm766, %v1004, %v1003
    %v1006 = vrot.slane %v860, 4
    %v1007 = vsel %vm768, %v1006, %v1005
    %v1008 = vrot.slane %v863, 3
    %v1009 = vsel %vm770, %v1008, %v1007
    %v1010 = vrot.slane %v866, 2
    %v1011 = vsel %vm772, %v1010, %v1009
    %v1012 = vrot.slane %v869, 1
    %v1013 = vsel %vm774, %v1012, %v1011
    %v1014 = vsel %vm776, %v872, %v1013
    %1015 = vrot.lane.b32.xlu0 %v1014, 92
    %v1016 = vpop.permute.xlu0 %1015
    %v1018 = vsel %vm113, %v800, %v897
    %vm1019 = vcmask 556032
    %v1020 = vsel %vm1019, %v1018, %v914
    %vm1021 = vcmask 588800
    %v1022 = vsel %vm1021, %v1020, %v931
    %vm1023 = vcmask 621568
    %v1024 = vsel %vm1023, %v1022, %v948
    %vm1025 = vcmask 654336
    %v1026 = vsel %vm1025, %v1024, %v965
    %vm1027 = vcmask 687104
    %v1028 = vsel %vm1027, %v1026, %v982
    %vm1029 = vcmask 719872
    %v1030 = vsel %vm1029, %v1028, %v999
    %vm1031 = vcmask 752640
    %v1032 = vsel %vm1031, %v1030, %v1016
    %vm1033 = vcmask 785408
    %v1034 = vsel %vm1033, %v1032, 0.0
    %1035 = vst [vmem:[#allocation10] sm:$0xff] %v1034
    // Predicated region
    $region54: #{tpu_custom_call.1} parent=1 // pred_check
      _
    $region55: #{tpu_custom_call.1} parent=1 // pred_check_branch
      %1037 = sbr.rel (0) target = $region57
    $region56: #{tpu_custom_call.1} parent=1 // pred_region
      %1039 = vsyncadd [#allocation4], 0
      %s1041 = sshll.u32 [#allocation10], 4
      %s1042 = int_to_ptr.vmem [resolvable:$true] %s1041
      %s1043 = sshll.u32 %s9, 4
      %s1044 = int_to_ptr.hbm [resolvable:$true] %s1043
      %1046 = dma.vmem_to_hbm [thread:$0]  %s1042, 128, %s1044, [#allocation4]
    $region57: #{tpu_custom_call.1} parent=1 // pred_fallthru
      _
    // Predicated region
    $region58: #{tpu_custom_call.1} parent=1 // pred_check
      _
    $region59: #{tpu_custom_call.1} parent=1 // pred_check_branch
      %1048 = sbr.rel (0) target = $region61
    $region60: #{tpu_custom_call.1} parent=1 // pred_region
      %1050 = dma.done [#allocation4], 128
    $region61: #{tpu_custom_call.1} parent=1 // pred_fallthru
      _
    %1051 = vsyncpa [#allocation3], 1
    %1052 = vsyncpa [#allocation6], 1
    %1053 = vsyncpa [#allocation9], 1
    %1054 = vsyncpa [#allocation4], 1

</llo_original>
